<compile_context>
chip_gen: v6e
topology: v6e:2x2x1
jax: 0.10.0
libtpu: 0.0.40
codegen_flags: <defaults>
</compile_context>

<pallas_src>
from functools import partial

import jax
import jax.numpy as jnp
from jax import lax
from jax.experimental import pallas as pl
from jax.experimental.pallas import tpu as pltpu


def _round_up(v, m):
    return ((v + m - 1) // m) * m


def _global_sa_kernel(seg_lo_ref, seg_hi_ref,            # scalar prefetch (SMEM)
                      x_ref, pos_ref, bid_ref,            # per-point tiles [T, *]
                      w1x_ref, w1p_ref, b1_ref,
                      w2_ref, b2_ref, w3_ref, b3_ref,     # resident MLP weights
                      out_ref,                            # [B, C_pad] partial-max accumulator
                      *, tiles_per_split):
    c = pl.program_id(0)      # megacore split index
    i = pl.program_id(1)      # N-tile index within this split

    # Initialize this split's resident accumulator at its first tile.
    @pl.when(i == 0)
    def _():
        out_ref[...] = jnp.full(out_ref.shape, -jnp.inf, dtype=out_ref.dtype)

    # ---- shared point-wise MLP (layer 1 split into x / pos parts: no lane concat) ----
    h = (jnp.dot(x_ref[...], w1x_ref[...], preferred_element_type=jnp.float32)
         + jnp.dot(pos_ref[...], w1p_ref[...], preferred_element_type=jnp.float32)
         + b1_ref[...])
    h = jnp.maximum(h, 0.0)
    h = jnp.maximum(
        jnp.dot(h, w2_ref[...], preferred_element_type=jnp.float32) + b2_ref[...], 0.0)
    h = jnp.dot(h, w3_ref[...], preferred_element_type=jnp.float32) + b3_ref[...]   # [T, C_pad]

    bids = bid_ref[...]                                   # [T, 1] int32 (padding rows carry id B)

    # ---- global_max_pool: scan only the segment ids present in this tile ----
    tile_idx = c * tiles_per_split + i
    lo = seg_lo_ref[tile_idx]
    hi = seg_hi_ref[tile_idx]

    def seg_body(b, carry):
        # Masked max over the points of segment b in this tile (lane-dense [1, C_pad] store).
        seg_max = jnp.max(jnp.where(bids == b, h, -jnp.inf), axis=0, keepdims=True)
        cur = out_ref[pl.ds(b, 1), :]
        out_ref[pl.ds(b, 1), :] = jnp.maximum(cur, seg_max)
        return carry

    lax.fori_loop(lo, hi + 1, seg_body, 0)


def global_sa_module(x, pos, batch_ids, params, num_segments, *,
                     tile_n=512, num_splits=2):
    """Pallas implementation of GlobalSAModule.forward.

    Returns (features [B, C_out], pos_zeros [B, 3], batch_arange [B]).
    """
    w1, b1, w2, b2, w3, b3 = params
    n, c_in = x.shape
    h1 = w1.shape[1]
    h2 = w2.shape[1]
    c_out = w3.shape[1]
    c_pad = _round_up(c_out, 128)           # lane-dense accumulator / stores

    x32 = x.astype(jnp.float32)
    pos32 = pos.astype(jnp.float32)
    bids = batch_ids.astype(jnp.int32)

    # Split W1 into x- and pos- parts (removes the in-kernel lane-axis concat).
    w1x = w1[:c_in].astype(jnp.float32)
    w1p = w1[c_in:].astype(jnp.float32)
    b1f = b1.reshape(1, h1).astype(jnp.float32)
    w2f = w2.astype(jnp.float32)
    b2f = b2.reshape(1, h2).astype(jnp.float32)
    # Zero-pad the last layer to a 128-multiple output width (sliced off after the call).
    w3p = jnp.pad(w3.astype(jnp.float32), ((0, 0), (0, c_pad - c_out)))
    b3p = jnp.pad(b3.reshape(1, c_out).astype(jnp.float32), ((0, 0), (0, c_pad - c_out)))

    # N tiling: shrink the tile for tiny inputs, pad N so every tile is full.
    tile_n = min(tile_n, max(8, _round_up(pl.cdiv(n, num_splits), 8)))
    tiles_per_split = pl.cdiv(n, tile_n * num_splits)
    n_pad = num_splits * tiles_per_split * tile_n
    pad = n_pad - n
    x_p = jnp.pad(x32, ((0, pad), (0, 0)))
    pos_p = jnp.pad(pos32, ((0, pad), (0, 0)))
    bid_p = jnp.pad(bids, ((0, pad),), constant_values=num_segments)    # sentinel id B
    bid2d = bid_p.reshape(n_pad, 1)

    # Per-tile segment-id range (PyG batch is sorted => contiguous; the sentinel id and
    # unsorted inputs only widen the scanned range, never break correctness).
    tiles_total = num_splits * tiles_per_split
    bid_tiles = bid_p.reshape(tiles_total, tile_n)
    seg_lo = jnp.clip(jnp.min(bid_tiles, axis=1), 0, num_segments - 1).astype(jnp.int32)
    seg_hi = jnp.clip(jnp.max(bid_tiles, axis=1), 0, num_segments - 1).astype(jnp.int32)

    pt_map = lambda c, i, lo, hi: (c * tiles_per_split + i, 0)
    w_map = lambda c, i, lo, hi: (0, 0)

    kernel = partial(_global_sa_kernel, tiles_per_split=tiles_per_split)
    partials = pl.pallas_call(
        kernel,
        out_shape=jax.ShapeDtypeStruct((num_splits, num_segments, c_pad), jnp.float32),
        grid_spec=pltpu.PrefetchScalarGridSpec(
            num_scalar_prefetch=2,
            grid=(num_splits, tiles_per_split),
            in_specs=[
                pl.BlockSpec((tile_n, c_in), pt_map),        # x
                pl.BlockSpec((tile_n, 3), pt_map),           # pos
                pl.BlockSpec((tile_n, 1), pt_map),           # batch ids
                pl.BlockSpec((c_in, h1), w_map),             # W1 (x part)
                pl.BlockSpec((3, h1), w_map),                # W1 (pos part)
                pl.BlockSpec((1, h1), w_map),                # b1
                pl.BlockSpec((h1, h2), w_map),               # W2
                pl.BlockSpec((1, h2), w_map),                # b2
                pl.BlockSpec((h2, c_pad), w_map),            # W3 (lane-padded)
                pl.BlockSpec((1, c_pad), w_map),              # b3 (lane-padded)
            ],
            out_specs=pl.BlockSpec((None, num_segments, c_pad),
                                   lambda c, i, lo, hi: (c, 0, 0)),
        ),
        compiler_params=pltpu.CompilerParams(
            dimension_semantics=("parallel", "arbitrary")),
    )(seg_lo, seg_hi, x_p, pos_p, bid2d,
      w1x, w1p, b1f, w2f, b2f, w3p, b3p)

    # Combine the per-core partial maxima, drop the lane padding.
    # TODO(synk): segments with zero points stay -inf here (matches jax.ops.segment_max);
    # PyG's global_max_pool fills empty segments differently.
    feats = jnp.max(partials, axis=0)[:, :c_out]
    new_pos = jnp.zeros((num_segments, 3), dtype=pos.dtype)
    new_batch = jnp.arange(num_segments, dtype=jnp.int32)
    return feats, new_pos, new_batch


def _reference(x, pos, batch_ids, params, num_segments):
    """Pure-JAX reference mirroring the PyTorch semantics."""
    w1, b1, w2, b2, w3, b3 = params
    xp = jnp.concatenate([x, pos], axis=1)
    h = jnp.maximum(xp @ w1 + b1, 0.0)
    h = jnp.maximum(h @ w2 + b2, 0.0)
    h = h @ w3 + b3
    out = jax.ops.segment_max(h, batch_ids, num_segments=num_segments)
    return out


if __name__ == "__main__":
    key = jax.random.PRNGKey(0)

    # Small synthetic problem: N points, B batches, C_in features, MLP 7->32->32->64.
    N, B, C_IN = 64, 4, 4
    H1, H2, C_OUT = 32, 32, 64

    k = jax.random.split(key, 9)
    x = jax.random.normal(k[0], (N, C_IN), dtype=jnp.float32)
    pos = jax.random.normal(k[1], (N, 3), dtype=jnp.float32)
    batch_ids = jnp.repeat(jnp.arange(B, dtype=jnp.int32), N // B)   # sorted, all populated

    def init_lin(kw, kb, fan_in, fan_out):
        w = jax.random.normal(kw, (fan_in, fan_out), dtype=jnp.float32) * (1.0 / fan_in) ** 0.5
        b = jax.random.normal(kb, (1, fan_out), dtype=jnp.float32) * 0.01
        return w, b

    w1, b1 = init_lin(k[2], k[3], C_IN + 3, H1)
    w2, b2 = init_lin(k[4], k[5], H1, H2)
    w3, b3 = init_lin(k[6], k[7], H2, C_OUT)
    params = (w1, b1, w2, b2, w3, b3)

    feats, new_pos, new_batch = global_sa_module(x, pos, batch_ids, params, B)
    jax.block_until_ready((feats, new_pos, new_batch))

    # Correctness check against pure-JAX reference.
    ref = _reference(x, pos, batch_ids, params, B)
    assert feats.shape == (B, C_OUT)
    assert new_pos.shape == (B, 3) and jnp.all(new_pos == 0)
    assert new_batch.shape == (B,) and jnp.all(new_batch == jnp.arange(B))
    assert jnp.allclose(feats, ref, atol=1e-4, rtol=1e-4), "mismatch vs reference"

    print("KERNEL_OK")
</pallas_src>

<mosaic_0001>
module attributes {stable_mosaic.version = 11 : i64} {
  func.func @_global_sa_kernel(%arg0: i32, %arg1: i32, %arg2: memref<2xi32, #tpu.memory_space<smem>>, %arg3: memref<2xi32, #tpu.memory_space<smem>>, %arg4: memref<32x4xf32, #tpu.memory_space<vmem>>, %arg5: memref<32x3xf32, #tpu.memory_space<vmem>>, %arg6: memref<32x1xi32, #tpu.memory_space<vmem>>, %arg7: memref<4x32xf32, #tpu.memory_space<vmem>>, %arg8: memref<3x32xf32, #tpu.memory_space<vmem>>, %arg9: memref<1x32xf32, #tpu.memory_space<vmem>>, %arg10: memref<32x32xf32, #tpu.memory_space<vmem>>, %arg11: memref<1x32xf32, #tpu.memory_space<vmem>>, %arg12: memref<32x128xf32, #tpu.memory_space<vmem>>, %arg13: memref<1x128xf32, #tpu.memory_space<vmem>>, %arg14: memref<1x4x128xf32, #tpu.memory_space<vmem>>) attributes {dimension_semantics = [#tpu.dimension_semantics<parallel>, #tpu.dimension_semantics<arbitrary>], iteration_bounds = array<i64: 2, 1>, scalar_prefetch = 2 : i64, scratch_operands = 0 : i64, tpu.core_type = #tpu.core_type<tc>, window_params = [{transform_indices = @transform_0, window_bounds = array<i64: 32, 4>}, {transform_indices = @transform_1, window_bounds = array<i64: 32, 3>}, {transform_indices = @transform_2, window_bounds = array<i64: 32, 1>}, {pipeline_mode = #tpu.pipeline_mode<synchronous>, transform_indices = @transform_3, window_bounds = array<i64: 4, 32>}, {pipeline_mode = #tpu.pipeline_mode<synchronous>, transform_indices = @transform_4, window_bounds = array<i64: 3, 32>}, {pipeline_mode = #tpu.pipeline_mode<synchronous>, transform_indices = @transform_5, window_bounds = array<i64: 1, 32>}, {pipeline_mode = #tpu.pipeline_mode<synchronous>, transform_indices = @transform_6, window_bounds = array<i64: 32, 32>}, {pipeline_mode = #tpu.pipeline_mode<synchronous>, transform_indices = @transform_7, window_bounds = array<i64: 1, 32>}, {pipeline_mode = #tpu.pipeline_mode<synchronous>, transform_indices = @transform_8, window_bounds = array<i64: 32, 128>}, {pipeline_mode = #tpu.pipeline_mode<synchronous>, transform_indices = @transform_9, window_bounds = array<i64: 1, 128>}, {transform_indices = @transform_10, window_bounds = array<i64: 1, 4, 128>}]} {
    %c0_i32 = arith.constant 0 : i32
    %0 = arith.cmpi eq, %arg1, %c0_i32 : i32
    %1 = arith.extui %0 : i1 to i32
    %c0_i32_0 = arith.constant 0 : i32
    %2 = arith.cmpi ne, %1, %c0_i32_0 : i32
    scf.if %2 {
      %cst_28 = arith.constant 0xFF800000 : f32
      %37 = vector.broadcast %cst_28 : f32 to vector<4x128xf32>
      %c0_29 = arith.constant 0 : index
      %c0_30 = arith.constant 0 : index
      %c0_31 = arith.constant 0 : index
      %38 = vector.load %arg14[%c0_29, %c0_30, %c0_31] : memref<1x4x128xf32, #tpu.memory_space<vmem>>, vector<1x4x128xf32>
      %39 = vector.shape_cast %38 : vector<1x4x128xf32> to vector<4x128xf32>
      %40 = vector.shape_cast %37 : vector<4x128xf32> to vector<1x4x128xf32>
      tpu.vector_store %arg14[%c0_29, %c0_30, %c0_31], %40 {strides = array<i32>} : memref<1x4x128xf32, #tpu.memory_space<vmem>>, vector<1x4x128xf32>,
    } else {
    }
    %c0 = arith.constant 0 : index
    %c0_1 = arith.constant 0 : index
    %3 = vector.load %arg4[%c0, %c0_1] : memref<32x4xf32, #tpu.memory_space<vmem>>, vector<32x4xf32>
    %c0_2 = arith.constant 0 : index
    %c0_3 = arith.constant 0 : index
    %4 = vector.load %arg7[%c0_2, %c0_3] : memref<4x32xf32, #tpu.memory_space<vmem>>, vector<4x32xf32>
    %cst = arith.constant dense<0.000000e+00> : vector<32x32xf32>
    %5 = tpu.matmul %3, %4, %cst {dimension_numbers = #tpu.dot_dimension_numbers<[1], [0], [0], [1], [0, 0, 1, 1], [], []>} : vector<32x4xf32>, vector<4x32xf32>, vector<32x32xf32> -> vector<32x32xf32>
    %c0_4 = arith.constant 0 : index
    %c0_5 = arith.constant 0 : index
    %6 = vector.load %arg5[%c0_4, %c0_5] : memref<32x3xf32, #tpu.memory_space<vmem>>, vector<32x3xf32>
    %c0_6 = arith.constant 0 : index
    %c0_7 = arith.constant 0 : index
    %7 = vector.load %arg8[%c0_6, %c0_7] : memref<3x32xf32, #tpu.memory_space<vmem>>, vector<3x32xf32>
    %cst_8 = arith.constant dense<0.000000e+00> : vector<32x32xf32>
    %8 = tpu.matmul %6, %7, %cst_8 {dimension_numbers = #tpu.dot_dimension_numbers<[1], [0], [0], [1], [0, 0, 1, 1], [], []>} : vector<32x3xf32>, vector<3x32xf32>, vector<32x32xf32> -> vector<32x32xf32>
    %9 = arith.addf %5, %8 : vector<32x32xf32>
    %c0_9 = arith.constant 0 : index
    %c0_10 = arith.constant 0 : index
    %10 = vector.load %arg9[%c0_9, %c0_10] : memref<1x32xf32, #tpu.memory_space<vmem>>, vector<1x32xf32>
    %11 = vector.broadcast %10 : vector<1x32xf32> to vector<32x32xf32>
    %12 = arith.addf %9, %11 : vector<32x32xf32>
    %cst_11 = arith.constant 0.000000e+00 : f32
    %13 = vector.broadcast %cst_11 : f32 to vector<32x32xf32>
    %14 = arith.maximumf %12, %13 : vector<32x32xf32>
    %c0_12 = arith.constant 0 : index
    %c0_13 = arith.constant 0 : index
    %15 = vector.load %arg10[%c0_12, %c0_13] : memref<32x32xf32, #tpu.memory_space<vmem>>, vector<32x32xf32>
    %cst_14 = arith.constant dense<0.000000e+00> : vector<32x32xf32>
    %16 = tpu.matmul %14, %15, %cst_14 {dimension_numbers = #tpu.dot_dimension_numbers<[1], [0], [0], [1], [0, 0, 1, 1], [], []>} : vector<32x32xf32>, vector<32x32xf32>, vector<32x32xf32> -> vector<32x32xf32>
    %c0_15 = arith.constant 0 : index
    %c0_16 = arith.constant 0 : index
    %17 = vector.load %arg11[%c0_15, %c0_16] : memref<1x32xf32, #tpu.memory_space<vmem>>, vector<1x32xf32>
    %18 = vector.broadcast %17 : vector<1x32xf32> to vector<32x32xf32>
    %19 = arith.addf %16, %18 : vector<32x32xf32>
    %cst_17 = arith.constant 0.000000e+00 : f32
    %20 = vector.broadcast %cst_17 : f32 to vector<32x32xf32>
    %21 = arith.maximumf %19, %20 : vector<32x32xf32>
    %c0_18 = arith.constant 0 : index
    %c0_19 = arith.constant 0 : index
    %22 = vector.load %arg12[%c0_18, %c0_19] : memref<32x128xf32, #tpu.memory_space<vmem>>, vector<32x128xf32>
    %cst_20 = arith.constant dense<0.000000e+00> : vector<32x128xf32>
    %23 = tpu.matmul %21, %22, %cst_20 {dimension_numbers = #tpu.dot_dimension_numbers<[1], [0], [0], [1], [0, 0, 1, 1], [], []>} : vector<32x32xf32>, vector<32x128xf32>, vector<32x128xf32> -> vector<32x128xf32>
    %c0_21 = arith.constant 0 : index
    %c0_22 = arith.constant 0 : index
    %24 = vector.load %arg13[%c0_21, %c0_22] : memref<1x128xf32, #tpu.memory_space<vmem>>, vector<1x128xf32>
    %25 = vector.broadcast %24 : vector<1x128xf32> to vector<32x128xf32>
    %26 = arith.addf %23, %25 : vector<32x128xf32>
    %c0_23 = arith.constant 0 : index
    %c0_24 = arith.constant 0 : index
    %27 = vector.load %arg6[%c0_23, %c0_24] : memref<32x1xi32, #tpu.memory_space<vmem>>, vector<32x1xi32>
    %c1_i32 = arith.constant 1 : i32
    %28 = arith.muli %arg0, %c1_i32 : i32
    %29 = arith.addi %28, %arg1 : i32
    %30 = arith.index_cast %29 : i32 to index
    %31 = memref.load %arg2[%30] : memref<2xi32, #tpu.memory_space<smem>>
    %32 = arith.index_cast %29 : i32 to index
    %33 = memref.load %arg3[%32] : memref<2xi32, #tpu.memory_space<smem>>
    %c1_i32_25 = arith.constant 1 : i32
    %34 = arith.addi %33, %c1_i32_25 : i32
    %c0_i32_26 = arith.constant 0 : i32
    %35 = arith.subi %34, %31 : i32
    %36 = arith.addi %31, %35 : i32
    %c1_i32_27 = arith.constant 1 : i32
    scf.for %arg15 = %31 to %36 step %c1_i32_27  : i32 {
      %37 = vector.broadcast %arg15 : i32 to vector<32x1xi32>
      %38 = arith.cmpi eq, %27, %37 : vector<32x1xi32>
      %cst_28 = arith.constant 0xFF800000 : f32
      %39 = vector.shape_cast %38 : vector<32x1xi1> to vector<32x1xi1>
      %40 = vector.broadcast %39 : vector<32x1xi1> to vector<32x128xi1>
      %41 = vector.broadcast %cst_28 : f32 to vector<32x128xf32>
      %42 = arith.select %40, %26, %41 : vector<32x128xi1>, vector<32x128xf32>
      %cst_29 = arith.constant dense<0xFF800000> : vector<128xf32>
      %43 = vector.multi_reduction <maximumf>, %42, %cst_29 [0] : vector<32x128xf32> to vector<128xf32>
      %44 = vector.shape_cast %43 : vector<128xf32> to vector<1x128xf32>
      %c0_30 = arith.constant 0 : index
      %45 = arith.index_cast %arg15 : i32 to index
      %c0_31 = arith.constant 0 : index
      %46 = vector.load %arg14[%c0_30, %45, %c0_31] : memref<1x4x128xf32, #tpu.memory_space<vmem>>, vector<1x1x128xf32>
      %47 = vector.shape_cast %46 : vector<1x1x128xf32> to vector<1x128xf32>
      %48 = arith.maximumf %47, %44 : vector<1x128xf32>
      %c0_32 = arith.constant 0 : index
      %49 = arith.index_cast %arg15 : i32 to index
      %c0_33 = arith.constant 0 : index
      %50 = vector.load %arg14[%c0_32, %49, %c0_33] : memref<1x4x128xf32, #tpu.memory_space<vmem>>, vector<1x1x128xf32>
      %51 = vector.shape_cast %50 : vector<1x1x128xf32> to vector<1x128xf32>
      %52 = vector.shape_cast %48 : vector<1x128xf32> to vector<1x1x128xf32>
      tpu.vector_store %arg14[%c0_32, %49, %c0_33], %52 {strides = array<i32>} : memref<1x4x128xf32, #tpu.memory_space<vmem>>, vector<1x1x128xf32>,
    }
    return
  }
  func.func @transform_0(%arg0: i32, %arg1: i32, %arg2: memref<2xi32, #tpu.memory_space<smem>>, %arg3: memref<2xi32, #tpu.memory_space<smem>>) -> (i32, i32) {
    %c1_i32 = arith.constant 1 : i32
    %0 = arith.muli %arg0, %c1_i32 : i32
    %1 = arith.addi %0, %arg1 : i32
    %c0_i32 = arith.constant 0 : i32
    %c0_i32_0 = arith.constant 0 : i32
    return %1, %c0_i32 : i32, i32
  }
  func.func @transform_1(%arg0: i32, %arg1: i32, %arg2: memref<2xi32, #tpu.memory_space<smem>>, %arg3: memref<2xi32, #tpu.memory_space<smem>>) -> (i32, i32) {
    %c1_i32 = arith.constant 1 : i32
    %0 = arith.muli %arg0, %c1_i32 : i32
    %1 = arith.addi %0, %arg1 : i32
    %c0_i32 = arith.constant 0 : i32
    %c0_i32_0 = arith.constant 0 : i32
    return %1, %c0_i32 : i32, i32
  }
  func.func @transform_2(%arg0: i32, %arg1: i32, %arg2: memref<2xi32, #tpu.memory_space<smem>>, %arg3: memref<2xi32, #tpu.memory_space<smem>>) -> (i32, i32) {
    %c1_i32 = arith.constant 1 : i32
    %0 = arith.muli %arg0, %c1_i32 : i32
    %1 = arith.addi %0, %arg1 : i32
    %c0_i32 = arith.constant 0 : i32
    %c0_i32_0 = arith.constant 0 : i32
    return %1, %c0_i32 : i32, i32
  }
  func.func @transform_3(%arg0: i32, %arg1: i32, %arg2: memref<2xi32, #tpu.memory_space<smem>>, %arg3: memref<2xi32, #tpu.memory_space<smem>>) -> (i32, i32) {
    %c0_i32 = arith.constant 0 : i32
    %c0_i32_0 = arith.constant 0 : i32
    %c0_i32_1 = arith.constant 0 : i32
    return %c0_i32, %c0_i32_0 : i32, i32
  }
  func.func @transform_4(%arg0: i32, %arg1: i32, %arg2: memref<2xi32, #tpu.memory_space<smem>>, %arg3: memref<2xi32, #tpu.memory_space<smem>>) -> (i32, i32) {
    %c0_i32 = arith.constant 0 : i32
    %c0_i32_0 = arith.constant 0 : i32
    %c0_i32_1 = arith.constant 0 : i32
    return %c0_i32, %c0_i32_0 : i32, i32
  }
  func.func @transform_5(%arg0: i32, %arg1: i32, %arg2: memref<2xi32, #tpu.memory_space<smem>>, %arg3: memref<2xi32, #tpu.memory_space<smem>>) -> (i32, i32) {
    %c0_i32 = arith.constant 0 : i32
    %c0_i32_0 = arith.constant 0 : i32
    %c0_i32_1 = arith.constant 0 : i32
    return %c0_i32, %c0_i32_0 : i32, i32
  }
  func.func @transform_6(%arg0: i32, %arg1: i32, %arg2: memref<2xi32, #tpu.memory_space<smem>>, %arg3: memref<2xi32, #tpu.memory_space<smem>>) -> (i32, i32) {
    %c0_i32 = arith.constant 0 : i32
    %c0_i32_0 = arith.constant 0 : i32
    %c0_i32_1 = arith.constant 0 : i32
    return %c0_i32, %c0_i32_0 : i32, i32
  }
  func.func @transform_7(%arg0: i32, %arg1: i32, %arg2: memref<2xi32, #tpu.memory_space<smem>>, %arg3: memref<2xi32, #tpu.memory_space<smem>>) -> (i32, i32) {
    %c0_i32 = arith.constant 0 : i32
    %c0_i32_0 = arith.constant 0 : i32
    %c0_i32_1 = arith.constant 0 : i32
    return %c0_i32, %c0_i32_0 : i32, i32
  }
  func.func @transform_8(%arg0: i32, %arg1: i32, %arg2: memref<2xi32, #tpu.memory_space<smem>>, %arg3: memref<2xi32, #tpu.memory_space<smem>>) -> (i32, i32) {
    %c0_i32 = arith.constant 0 : i32
    %c0_i32_0 = arith.constant 0 : i32
    %c0_i32_1 = arith.constant 0 : i32
    return %c0_i32, %c0_i32_0 : i32, i32
  }
  func.func @transform_9(%arg0: i32, %arg1: i32, %arg2: memref<2xi32, #tpu.memory_space<smem>>, %arg3: memref<2xi32, #tpu.memory_space<smem>>) -> (i32, i32) {
    %c0_i32 = arith.constant 0 : i32
    %c0_i32_0 = arith.constant 0 : i32
    %c0_i32_1 = arith.constant 0 : i32
    return %c0_i32, %c0_i32_0 : i32, i32
  }
  func.func @transform_10(%arg0: i32, %arg1: i32, %arg2: memref<2xi32, #tpu.memory_space<smem>>, %arg3: memref<2xi32, #tpu.memory_space<smem>>) -> (i32, i32, i32) {
    %c0_i32 = arith.constant 0 : i32
    %c0_i32_0 = arith.constant 0 : i32
    %c0_i32_1 = arith.constant 0 : i32
    return %arg0, %c0_i32, %c0_i32_0 : i32, i32, i32
  }
}

</mosaic_0001>

<llo_original>
// kernel: tpu_custom_call.1
$region0: #{tpu_custom_call.1}
  #allocation0 [shape = 'u32[]', space=smem, size = 0x4, offset = 0x4, fixed_abs, tag = 'smem constant byte address 0x4 - core index']
  #allocation1 [shape = 'u32[144,128]{1,0:T(1,128)}', space=vmem, size = 0x12000, scoped, tag = 'internal scratch']
  #allocation2 [shape = 's32[1]{0}', space=sflag, size = 0x4, scoped, tag = 'scoped memory for tpu_custom_call.1']
  #allocation3 [shape = 'u8[512]{0}', space=smem, size = 0x200, scoped, tag = 'prefetched SMEM operand 0']
  #allocation4 [shape = 'u8[512]{0}', space=smem, size = 0x200, scoped, tag = 'prefetched SMEM operand 1']
  %s0 = inlined_call_operand.vmem [shape: s32[2], index: 0, kind: input, shape index: {}]
  %s1 = inlined_call_operand.vmem [shape: s32[2], index: 1, kind: input, shape index: {}]
  %s2 = inlined_call_operand.vmem [shape: f32[64,4], index: 2, kind: input, shape index: {}]
  %s3 = inlined_call_operand.vmem [shape: f32[64,3], index: 3, kind: input, shape index: {}]
  %s4 = inlined_call_operand.vmem [shape: s32[64,1], index: 4, kind: input, shape index: {}]
  %s5 = inlined_call_operand.vmem [shape: f32[4,32], index: 5, kind: input, shape index: {}]
  %s6 = inlined_call_operand.vmem [shape: f32[3,32], index: 6, kind: input, shape index: {}]
  %s7 = inlined_call_operand.vmem [shape: f32[1,32], index: 7, kind: input, shape index: {}]
  %s8 = inlined_call_operand.vmem [shape: f32[32,32], index: 8, kind: input, shape index: {}]
  %s9 = inlined_call_operand.vmem [shape: f32[1,32], index: 9, kind: input, shape index: {}]
  %s10 = inlined_call_operand.vmem [shape: f32[32,128], index: 10, kind: input, shape index: {}]
  %s11 = inlined_call_operand.vmem [shape: f32[1,128], index: 11, kind: input, shape index: {}]
  %s12 = inlined_call_operand.hbm [shape: f32[2,4,128], index: 12, kind: output, shape index: {}]
  %s13 = sld [smem:[#allocation0]]
  $region84: #{tpu_custom_call.1} parent=0
    _
  %s15 = ssub.s32 1, %s13
  %s16 = scalar_select 0, %s15, %s13
  %s17 = sshll.u32 %s0, 4
  %s18 = int_to_ptr.vmem [resolvable:$true] %s17
  %20 = dma.vmem_to_smem %s18, 16, [#allocation3], [#allocation2]
  %s21 = sshll.u32 %s1, 4
  %s22 = int_to_ptr.vmem [resolvable:$true] %s21
  %24 = dma.vmem_to_smem %s22, 16, [#allocation4], [#allocation2]
  %25 = dma.done [#allocation2], 32
  %26 = sfence
  $region1: #{tpu_custom_call.1} parent=0
    #allocation5 [shape = 'u8[4096]{0}', space=vmem, size = 0x1000, scoped, tag = 'output window, operand 0']
    #allocation6 [shape = 's32[2]{0}', space=sflag, size = 0x8, scoped, tag = 'scoped memory for tpu_custom_call.1']
    %27 = vsyncpa [#allocation6], 0
    %s28 = scalar_lea.sflag [#allocation6], 1
    %29 = vsyncpa %s28, 0
    loop: start=0, step=1, limit=4
    $region2: #{tpu_custom_call.1} parent=1 // loop_pre_header
      _
    $region3: #{tpu_custom_call.1} parent=1 // loop_header
      %s31 = sphi 0, %s35
      %p32 = scmp.ge.s32.totalorder %s31, 4
      %s38 = sphi 0, %s50
      %s39 = sphi 0, %s46
      %s40 = sphi 0, %s38
      %s41 = sphi 0, %s39
      %s42 = sphi 0, %s40
      %s43 = sphi 0, %s41
      %s55 = sphi 0, %s57
      %s58 = sphi 0, %s55
      %s59 = sphi 0, %s58
      %s75 = sphi 0, %s59
      %s83 = sphi 0, %s85
      %s86 = sphi 0, %s83
      %s87 = sphi 0, %s86
      %s103 = sphi 0, %s87
      %s111 = sphi 0, %s113
      %s114 = sphi 0, %s111
      %s115 = sphi 0, %s114
      %s131 = sphi 0, %s115
      %s135 = sphi 0, %s135
      %s137 = sphi 0, %s135
      %s138 = sphi 0, %s137
      %s152 = sphi 0, %s138
      %s156 = sphi 0, %s156
      %s158 = sphi 0, %s156
      %s159 = sphi 0, %s158
      %s173 = sphi 0, %s159
      %s177 = sphi 0, %s177
      %s179 = sphi 0, %s177
      %s180 = sphi 0, %s179
      %s194 = sphi 0, %s180
      %s198 = sphi 0, %s198
      %s200 = sphi 0, %s198
      %s201 = sphi 0, %s200
      %s215 = sphi 0, %s201
      %s219 = sphi 0, %s219
      %s221 = sphi 0, %s219
      %s222 = sphi 0, %s221
      %s236 = sphi 0, %s222
      %s240 = sphi 0, %s240
      %s242 = sphi 0, %s240
      %s243 = sphi 0, %s242
      %s257 = sphi 0, %s243
      %s261 = sphi 0, %s261
      %s263 = sphi 0, %s261
      %s264 = sphi 0, %s263
      %s278 = sphi 0, %s264
      %s284 = sphi 0, %s286
      %s287 = sphi 0, %s284
      %s288 = sphi 0, %s287
      %s304 = sphi 0, %s288
    $region4: #{tpu_custom_call.1} parent=1 // loop_header_branch
      %34 = sbr.rel (%p32) target = $region8
    $region5: #{tpu_custom_call.1} parent=1 // loop_body
      %s36 = ssub.s32 %s31, 1
      %s37 = ssub.s32 %s31, 2
      %s44 = sadd.s32 1, %s39
      %p45 = scmp.ge.s32.totalorder %s44, 1
      %s46 = scalar_select %p45, 0, %s44
      %s47 = sadd.s32 1, %s38
      %s48 = scalar_select %p45, %s47, %s38
      %p49 = scmp.ge.s32.totalorder %s48, 2
      %s50 = scalar_select %p49, 0, %s48
      %s51 = sadd.s32 %s38, %s39
      %s52 = sadd.s32 %s50, %s46
      %s53 = ssub.s32 %s51, %s52
      %p54 = scmp.eq.s32.totalorder %s53, 0
      %s56 = sadd.s32 %s55, 1
      %s57 = scalar_select %p54, %s55, %s56
      %p60 = pneg %p54
      %p61 = scmp.eq.s32.totalorder %s31, 1
      %p62 = por %p60, %p61
      %p63 = scmp.ne.s32.totalorder %s55, %s58
      %p64 = scmp.eq.s32.totalorder %s31, 0
      %p65 = por %p63, %p64
      %p66 = scmp.ne.s32.totalorder %s55, %s58
      %p67 = scmp.eq.s32.totalorder %s36, 1
      %p68 = por %p66, %p67
      %p69 = scmp.ne.s32.totalorder %s58, %s59
      %p70 = scmp.eq.s32.totalorder %s36, 0
      %p71 = por %p69, %p70
      %p72 = scmp.ne.s32.totalorder %s58, %s59
      %p73 = scmp.eq.s32.totalorder %s37, 1
      %p74 = por %p72, %p73
      %p76 = scmp.ne.s32.totalorder %s59, %s75
      %p77 = scmp.eq.s32.totalorder %s37, 0
      %p78 = por %p76, %p77
      %s79 = sadd.s32 %s38, %s39
      %s80 = sadd.s32 %s50, %s46
      %s81 = ssub.s32 %s79, %s80
      %p82 = scmp.eq.s32.totalorder %s81, 0
      %s84 = sadd.s32 %s83, 1
      %s85 = scalar_select %p82, %s83, %s84
      %p88 = pneg %p82
      %p89 = scmp.eq.s32.totalorder %s31, 1
      %p90 = por %p88, %p89
      %p91 = scmp.ne.s32.totalorder %s83, %s86
      %p92 = scmp.eq.s32.totalorder %s31, 0
      %p93 = por %p91, %p92
      %p94 = scmp.ne.s32.totalorder %s83, %s86
      %p95 = scmp.eq.s32.totalorder %s36, 1
      %p96 = por %p94, %p95
      %p97 = scmp.ne.s32.totalorder %s86, %s87
      %p98 = scmp.eq.s32.totalorder %s36, 0
      %p99 = por %p97, %p98
      %p100 = scmp.ne.s32.totalorder %s86, %s87
      %p101 = scmp.eq.s32.totalorder %s37, 1
      %p102 = por %p100, %p101
      %p104 = scmp.ne.s32.totalorder %s87, %s103
      %p105 = scmp.eq.s32.totalorder %s37, 0
      %p106 = por %p104, %p105
      %s107 = sadd.s32 %s38, %s39
      %s108 = sadd.s32 %s50, %s46
      %s109 = ssub.s32 %s107, %s108
      %p110 = scmp.eq.s32.totalorder %s109, 0
      %s112 = sadd.s32 %s111, 1
      %s113 = scalar_select %p110, %s111, %s112
      %p116 = pneg %p110
      %p117 = scmp.eq.s32.totalorder %s31, 1
      %p118 = por %p116, %p117
      %p119 = scmp.ne.s32.totalorder %s111, %s114
      %p120 = scmp.eq.s32.totalorder %s31, 0
      %p121 = por %p119, %p120
      %p122 = scmp.ne.s32.totalorder %s111, %s114
      %p123 = scmp.eq.s32.totalorder %s36, 1
      %p124 = por %p122, %p123
      %p125 = scmp.ne.s32.totalorder %s114, %s115
      %p126 = scmp.eq.s32.totalorder %s36, 0
      %p127 = por %p125, %p126
      %p128 = scmp.ne.s32.totalorder %s114, %s115
      %p129 = scmp.eq.s32.totalorder %s37, 1
      %p130 = por %p128, %p129
      %p132 = scmp.ne.s32.totalorder %s115, %s131
      %p133 = scmp.eq.s32.totalorder %s37, 0
      %p134 = por %p132, %p133
      %s136 = sadd.s32 %s135, 1
      %p139 = scmp.eq.s32.totalorder %s31, 1
      %p140 = scmp.ne.s32.totalorder %s135, %s137
      %p141 = scmp.eq.s32.totalorder %s31, 0
      %p142 = por %p140, %p141
      %p143 = scmp.ne.s32.totalorder %s135, %s137
      %p144 = scmp.eq.s32.totalorder %s36, 1
      %p145 = por %p143, %p144
      %p146 = scmp.ne.s32.totalorder %s137, %s138
      %p147 = scmp.eq.s32.totalorder %s36, 0
      %p148 = por %p146, %p147
      %p149 = scmp.ne.s32.totalorder %s137, %s138
      %p150 = scmp.eq.s32.totalorder %s37, 1
      %p151 = por %p149, %p150
      %p153 = scmp.ne.s32.totalorder %s138, %s152
      %p154 = scmp.eq.s32.totalorder %s37, 0
      %p155 = por %p153, %p154
      %s157 = sadd.s32 %s156, 1
      %p160 = scmp.eq.s32.totalorder %s31, 1
      %p161 = scmp.ne.s32.totalorder %s156, %s158
      %p162 = scmp.eq.s32.totalorder %s31, 0
      %p163 = por %p161, %p162
      %p164 = scmp.ne.s32.totalorder %s156, %s158
      %p165 = scmp.eq.s32.totalorder %s36, 1
      %p166 = por %p164, %p165
      %p167 = scmp.ne.s32.totalorder %s158, %s159
      %p168 = scmp.eq.s32.totalorder %s36, 0
      %p169 = por %p167, %p168
      %p170 = scmp.ne.s32.totalorder %s158, %s159
      %p171 = scmp.eq.s32.totalorder %s37, 1
      %p172 = por %p170, %p171
      %p174 = scmp.ne.s32.totalorder %s159, %s173
      %p175 = scmp.eq.s32.totalorder %s37, 0
      %p176 = por %p174, %p175
      %s178 = sadd.s32 %s177, 1
      %p181 = scmp.eq.s32.totalorder %s31, 1
      %p182 = scmp.ne.s32.totalorder %s177, %s179
      %p183 = scmp.eq.s32.totalorder %s31, 0
      %p184 = por %p182, %p183
      %p185 = scmp.ne.s32.totalorder %s177, %s179
      %p186 = scmp.eq.s32.totalorder %s36, 1
      %p187 = por %p185, %p186
      %p188 = scmp.ne.s32.totalorder %s179, %s180
      %p189 = scmp.eq.s32.totalorder %s36, 0
      %p190 = por %p188, %p189
      %p191 = scmp.ne.s32.totalorder %s179, %s180
      %p192 = scmp.eq.s32.totalorder %s37, 1
      %p193 = por %p191, %p192
      %p195 = scmp.ne.s32.totalorder %s180, %s194
      %p196 = scmp.eq.s32.totalorder %s37, 0
      %p197 = por %p195, %p196
      %s199 = sadd.s32 %s198, 1
      %p202 = scmp.eq.s32.totalorder %s31, 1
      %p203 = scmp.ne.s32.totalorder %s198, %s200
      %p204 = scmp.eq.s32.totalorder %s31, 0
      %p205 = por %p203, %p204
      %p206 = scmp.ne.s32.totalorder %s198, %s200
      %p207 = scmp.eq.s32.totalorder %s36, 1
      %p208 = por %p206, %p207
      %p209 = scmp.ne.s32.totalorder %s200, %s201
      %p210 = scmp.eq.s32.totalorder %s36, 0
      %p211 = por %p209, %p210
      %p212 = scmp.ne.s32.totalorder %s200, %s201
      %p213 = scmp.eq.s32.totalorder %s37, 1
      %p214 = por %p212, %p213
      %p216 = scmp.ne.s32.totalorder %s201, %s215
      %p217 = scmp.eq.s32.totalorder %s37, 0
      %p218 = por %p216, %p217
      %s220 = sadd.s32 %s219, 1
      %p223 = scmp.eq.s32.totalorder %s31, 1
      %p224 = scmp.ne.s32.totalorder %s219, %s221
      %p225 = scmp.eq.s32.totalorder %s31, 0
      %p226 = por %p224, %p225
      %p227 = scmp.ne.s32.totalorder %s219, %s221
      %p228 = scmp.eq.s32.totalorder %s36, 1
      %p229 = por %p227, %p228
      %p230 = scmp.ne.s32.totalorder %s221, %s222
      %p231 = scmp.eq.s32.totalorder %s36, 0
      %p232 = por %p230, %p231
      %p233 = scmp.ne.s32.totalorder %s221, %s222
      %p234 = scmp.eq.s32.totalorder %s37, 1
      %p235 = por %p233, %p234
      %p237 = scmp.ne.s32.totalorder %s222, %s236
      %p238 = scmp.eq.s32.totalorder %s37, 0
      %p239 = por %p237, %p238
      %s241 = sadd.s32 %s240, 1
      %p244 = scmp.eq.s32.totalorder %s31, 1
      %p245 = scmp.ne.s32.totalorder %s240, %s242
      %p246 = scmp.eq.s32.totalorder %s31, 0
      %p247 = por %p245, %p246
      %p248 = scmp.ne.s32.totalorder %s240, %s242
      %p249 = scmp.eq.s32.totalorder %s36, 1
      %p250 = por %p248, %p249
      %p251 = scmp.ne.s32.totalorder %s242, %s243
      %p252 = scmp.eq.s32.totalorder %s36, 0
      %p253 = por %p251, %p252
      %p254 = scmp.ne.s32.totalorder %s242, %s243
      %p255 = scmp.eq.s32.totalorder %s37, 1
      %p256 = por %p254, %p255
      %p258 = scmp.ne.s32.totalorder %s243, %s257
      %p259 = scmp.eq.s32.totalorder %s37, 0
      %p260 = por %p258, %p259
      %s262 = sadd.s32 %s261, 1
      %p265 = scmp.eq.s32.totalorder %s31, 1
      %p266 = scmp.ne.s32.totalorder %s261, %s263
      %p267 = scmp.eq.s32.totalorder %s31, 0
      %p268 = por %p266, %p267
      %p269 = scmp.ne.s32.totalorder %s261, %s263
      %p270 = scmp.eq.s32.totalorder %s36, 1
      %p271 = por %p269, %p270
      %p272 = scmp.ne.s32.totalorder %s263, %s264
      %p273 = scmp.eq.s32.totalorder %s36, 0
      %p274 = por %p272, %p273
      %p275 = scmp.ne.s32.totalorder %s263, %s264
      %p276 = scmp.eq.s32.totalorder %s37, 1
      %p277 = por %p275, %p276
      %p279 = scmp.ne.s32.totalorder %s264, %s278
      %p280 = scmp.eq.s32.totalorder %s37, 0
      %p281 = por %p279, %p280
      %s282 = ssub.s32 %s38, %s50
      %p283 = scmp.eq.s32.totalorder %s282, 0
      %s285 = sadd.s32 %s284, 1
      %s286 = scalar_select %p283, %s284, %s285
      %p289 = pneg %p283
      %p290 = scmp.eq.s32.totalorder %s31, 1
      %p291 = por %p289, %p290
      %p292 = scmp.ne.s32.totalorder %s284, %s287
      %p293 = scmp.eq.s32.totalorder %s31, 0
      %p294 = por %p292, %p293
      %p295 = scmp.ne.s32.totalorder %s284, %s287
      %p296 = scmp.eq.s32.totalorder %s36, 1
      %p297 = por %p295, %p296
      %p298 = scmp.ne.s32.totalorder %s287, %s288
      %p299 = scmp.eq.s32.totalorder %s36, 0
      %p300 = por %p298, %p299
      %p301 = scmp.ne.s32.totalorder %s287, %s288
      %p302 = scmp.eq.s32.totalorder %s37, 1
      %p303 = por %p301, %p302
      %p305 = scmp.ne.s32.totalorder %s288, %s304
      %p306 = scmp.eq.s32.totalorder %s37, 0
      %p307 = por %p305, %p306
      %p308 = scmp.le.s32.totalorder 1, %s31
      %p309 = scmp.lt.s32.totalorder %s31, 3
      %p310 = pnand %p308, %p309
      %p311 = pneg %p310
      // Predicated region
      $region9: #{tpu_custom_call.1} parent=5 // pred_check
        _
      $region10: #{tpu_custom_call.1} parent=5 // pred_check_branch
        %313 = sbr.rel (%p310) target = $region12
      $region11: #{tpu_custom_call.1} parent=5 // pred_region
        %s314 = ssub.s32 %s31, 1
        // Predicated region
        $region13: #{tpu_custom_call.1} parent=11 // pred_check
          %p315 = pneg %p148
        $region14: #{tpu_custom_call.1} parent=11 // pred_check_branch
          %317 = sbr.rel (%p315) target = $region16
        $region15: #{tpu_custom_call.1} parent=11 // pred_region
          _
        $region16: #{tpu_custom_call.1} parent=11 // pred_fallthru
          _
        // Predicated region
        $region17: #{tpu_custom_call.1} parent=11 // pred_check
          %p318 = pneg %p169
        $region18: #{tpu_custom_call.1} parent=11 // pred_check_branch
          %320 = sbr.rel (%p318) target = $region20
        $region19: #{tpu_custom_call.1} parent=11 // pred_region
          _
        $region20: #{tpu_custom_call.1} parent=11 // pred_fallthru
          _
        // Predicated region
        $region21: #{tpu_custom_call.1} parent=11 // pred_check
          %p321 = pneg %p190
        $region22: #{tpu_custom_call.1} parent=11 // pred_check_branch
          %323 = sbr.rel (%p321) target = $region24
        $region23: #{tpu_custom_call.1} parent=11 // pred_region
          _
        $region24: #{tpu_custom_call.1} parent=11 // pred_fallthru
          _
        // Predicated region
        $region25: #{tpu_custom_call.1} parent=11 // pred_check
          %p324 = pneg %p211
        $region26: #{tpu_custom_call.1} parent=11 // pred_check_branch
          %326 = sbr.rel (%p324) target = $region28
        $region27: #{tpu_custom_call.1} parent=11 // pred_region
          _
        $region28: #{tpu_custom_call.1} parent=11 // pred_fallthru
          _
        // Predicated region
        $region29: #{tpu_custom_call.1} parent=11 // pred_check
          %p327 = pneg %p232
        $region30: #{tpu_custom_call.1} parent=11 // pred_check_branch
          %329 = sbr.rel (%p327) target = $region32
        $region31: #{tpu_custom_call.1} parent=11 // pred_region
          _
        $region32: #{tpu_custom_call.1} parent=11 // pred_fallthru
          _
        // Predicated region
        $region33: #{tpu_custom_call.1} parent=11 // pred_check
          %p330 = pneg %p253
        $region34: #{tpu_custom_call.1} parent=11 // pred_check_branch
          %332 = sbr.rel (%p330) target = $region36
        $region35: #{tpu_custom_call.1} parent=11 // pred_region
          _
        $region36: #{tpu_custom_call.1} parent=11 // pred_fallthru
          _
        // Predicated region
        $region37: #{tpu_custom_call.1} parent=11 // pred_check
          %p333 = pneg %p274
        $region38: #{tpu_custom_call.1} parent=11 // pred_check_branch
          %335 = sbr.rel (%p333) target = $region40
        $region39: #{tpu_custom_call.1} parent=11 // pred_region
          _
        $region40: #{tpu_custom_call.1} parent=11 // pred_fallthru
          _
      $region12: #{tpu_custom_call.1} parent=5 // pred_fallthru
        _
      %p336 = scmp.lt.s32.totalorder %s31, 2
      // Predicated region
      $region41: #{tpu_custom_call.1} parent=5 // pred_check
        %p337 = pneg %p336
      $region42: #{tpu_custom_call.1} parent=5 // pred_check_branch
        %339 = sbr.rel (%p337) target = $region44
      $region43: #{tpu_custom_call.1} parent=5 // pred_region
        // Predicated region
        $region45: #{tpu_custom_call.1} parent=43 // pred_check
          %p340 = pneg %p65
        $region46: #{tpu_custom_call.1} parent=43 // pred_check_branch
          %342 = sbr.rel (%p340) target = $region48
        $region47: #{tpu_custom_call.1} parent=43 // pred_region
          %s343 = sadd.s32 %s38, %s39
          %s344 = smul.u32 4, %s343
          %p345 = scmp.lt.s32.totalorder %s344, 7
          %s346 = scalar_select %p345, %s344, 7
          %s347 = smul.addr %s346, 8
          %s348 = scalar_lea.vmem %s2, %s347
          %s349 = sadd.s32 %s38, %s39
          %s350 = smul.u32 4, %s349
        $region48: #{tpu_custom_call.1} parent=43 // pred_fallthru
          _
        // Predicated region
        $region49: #{tpu_custom_call.1} parent=43 // pred_check
          %p351 = pneg %p93
        $region50: #{tpu_custom_call.1} parent=43 // pred_check_branch
          %353 = sbr.rel (%p351) target = $region52
        $region51: #{tpu_custom_call.1} parent=43 // pred_region
          %s354 = sadd.s32 %s38, %s39
          %s355 = smul.u32 4, %s354
          %p356 = scmp.lt.s32.totalorder %s355, 7
          %s357 = scalar_select %p356, %s355, 7
          %s358 = smul.addr %s357, 8
          %s359 = scalar_lea.vmem %s3, %s358
          %s360 = sadd.s32 %s38, %s39
          %s361 = smul.u32 4, %s360
        $region52: #{tpu_custom_call.1} parent=43 // pred_fallthru
          _
        // Predicated region
        $region53: #{tpu_custom_call.1} parent=43 // pred_check
          %p362 = pneg %p121
        $region54: #{tpu_custom_call.1} parent=43 // pred_check_branch
          %364 = sbr.rel (%p362) target = $region56
        $region55: #{tpu_custom_call.1} parent=43 // pred_region
          %s365 = sadd.s32 %s38, %s39
          %s366 = smul.u32 4, %s365
          %p367 = scmp.lt.s32.totalorder %s366, 7
          %s368 = scalar_select %p367, %s366, 7
          %s369 = smul.addr %s368, 8
          %s370 = scalar_lea.vmem %s4, %s369
          %s371 = sadd.s32 %s38, %s39
          %s372 = smul.u32 4, %s371
        $region56: #{tpu_custom_call.1} parent=43 // pred_fallthru
          _
      $region44: #{tpu_custom_call.1} parent=5 // pred_fallthru
        _
      %p373 = scmp.le.s32.totalorder 1, %s31
      %p374 = scmp.lt.s32.totalorder %s31, 3
      %p375 = pnand %p373, %p374
      %p376 = pneg %p375
      // Predicated region
      $region57: #{tpu_custom_call.1} parent=5 // pred_check
        _
      $region58: #{tpu_custom_call.1} parent=5 // pred_check_branch
        %378 = sbr.rel (%p375) target = $region60
      $region59: #{tpu_custom_call.1} parent=5 // pred_region
        %s379 = ssub.s32 %s31, 1
        %s380 = sadd.s32 %s40, %s41
        %s381 = smul.u32 4, %s380
        %p382 = scmp.lt.s32.totalorder %s381, 7
        %s383 = scalar_select %p382, %s381, 7
        %s384 = smul.addr %s383, 8
        %s385 = scalar_lea.vmem %s2, %s384
        %p386 = pneg %p71
        %p387 = pneg %p68
        %s388 = sadd.s32 %s40, %s41
        %s389 = smul.u32 4, %s388
        %p390 = scmp.lt.s32.totalorder %s389, 7
        %s391 = scalar_select %p390, %s389, 7
        %s392 = smul.addr %s391, 8
        %s393 = scalar_lea.vmem %s3, %s392
        %p394 = pneg %p99
        %p395 = pneg %p96
        %s396 = sadd.s32 %s40, %s41
        %s397 = smul.u32 4, %s396
        %p398 = scmp.lt.s32.totalorder %s397, 7
        %s399 = scalar_select %p398, %s397, 7
        %s400 = smul.addr %s399, 8
        %s401 = scalar_lea.vmem %s4, %s400
        %p402 = pneg %p127
        %p403 = pneg %p124
        %p404 = pneg %p148
        %p405 = pneg %p145
        %p406 = pneg %p169
        %p407 = pneg %p166
        %p408 = pneg %p190
        %p409 = pneg %p187
        %p410 = pneg %p211
        %p411 = pneg %p208
        %p412 = pneg %p232
        %p413 = pneg %p229
        %p414 = pneg %p253
        %p415 = pneg %p250
        %p416 = pneg %p274
        %p417 = pneg %p271
        %p418 = pneg %p300
        %p419 = pneg %p297
        %s420 = sand.u32 %s287, 1
        %s421 = scalar_lea.sflag [#allocation6], %s420
        %s422 = sand.u32 %s287, 1
        %s423 = smul.addr %s422, 4
        %s424 = scalar_lea.vmem [#allocation5], %s423
        %s425 = sadd.s32 %s40, %s41
        %s426 = smul.u32 4, %s425
        %p427 = scmp.lt.s32.totalorder %s426, 7
        %s428 = scalar_select %p427, %s426, 7
        %s429 = smul.addr %s428, 8
        %s430 = scalar_lea.vmem %s2, %s429
        %s431 = sadd.s32 %s40, %s41
        %s432 = smul.u32 4, %s431
        %s433 = sadd.s32 %s40, %s41
        %s434 = smul.u32 4, %s433
        %p435 = scmp.lt.s32.totalorder %s434, 7
        %s436 = scalar_select %p435, %s434, 7
        %s437 = smul.addr %s436, 8
        %s438 = scalar_lea.vmem %s3, %s437
        %s439 = sadd.s32 %s40, %s41
        %s440 = smul.u32 4, %s439
        %s441 = sadd.s32 %s40, %s41
        %s442 = smul.u32 4, %s441
        %p443 = scmp.lt.s32.totalorder %s442, 7
        %s444 = scalar_select %p443, %s442, 7
        %s445 = smul.addr %s444, 8
        %s446 = scalar_lea.vmem %s4, %s445
        %s447 = sadd.s32 %s40, %s41
        %s448 = smul.u32 4, %s447
        %p449 = scmp.eq.s32.totalorder %s41, 0
        // Predicated region
        $region61: #{tpu_custom_call.1} parent=59 // pred_check
          %p450 = pneg %p449
        $region62: #{tpu_custom_call.1} parent=59 // pred_check_branch
          %452 = sbr.rel (%p450) target = $region64
        $region63: #{tpu_custom_call.1} parent=59 // pred_region
          %453 = vst [vmem:[%s424] sm:$0xf] -inf
        $region64: #{tpu_custom_call.1} parent=59 // pred_fallthru
          _
        %v454 = vld [vmem:[%s430] sm:$0xff]
        %v455 = vld [vmem:[%s430 + $0x8] sm:$0xff]
        %v456 = vld [vmem:[%s430 + $0x10] sm:$0xff]
        %v457 = vld [vmem:[%s430 + $0x18] sm:$0xff]
        %v458 = vld [vmem:[%s5] sm:$0xf]
        %v459 = vld [vmem:[%s438] sm:$0xff]
        %v460 = vld [vmem:[%s438 + $0x8] sm:$0xff]
        %v461 = vld [vmem:[%s438 + $0x10] sm:$0xff]
        %v462 = vld [vmem:[%s438 + $0x18] sm:$0xff]
        %v463 = vld [vmem:[%s6] sm:$0x7]
        %vm464 = vcmask 23552
        %v466 = vsel %vm464, %v459, 0
        %v469 = vsel %vm464, %v460, 0
        %v472 = vsel %vm464, %v461, 0
        %v475 = vsel %vm464, %v462, 0
        %vm477 = vcmask 1042432
        %v479 = vsel %vm477, %v463, 0
        %481 = vmatprep.subr.mxu0 0.0
        %482 = vmatpush1.msra.mxu0 0.0
        %483 = vmatprep.subr.mxu0 0.0
        %484 = vmatpush1.msra.mxu0 0.0
        %485 = vmatprep.subr.mxu0 0.0
        %486 = vmatpush1.msra.mxu0 0.0
        %487 = vmatprep.subr.mxu0 0.0
        %488 = vmatpush1.msra.mxu0 0.0
        %489 = vmatprep.subr.mxu0 0.0
        %490 = vmatpush1.msra.mxu0 0.0
        %491 = vmatprep.subr.mxu0 0.0
        %492 = vmatpush1.msra.mxu0 0.0
        %493 = vmatprep.subr.mxu0 0.0
        %494 = vmatpush1.msra.mxu0 0.0
        %495 = vmatprep.subr.mxu0 0.0
        %496 = vmatpush1.msra.mxu0 0.0
        %497 = vmatprep.subr.mxu0 0.0
        %498 = vmatpush1.msra.mxu0 0.0
        %499 = vmatprep.subr.mxu0 0.0
        %500 = vmatpush1.msra.mxu0 0.0
        %501 = vmatprep.subr.mxu0 0.0
        %502 = vmatpush1.msra.mxu0 0.0
        %503 = vmatprep.subr.mxu0 0.0
        %504 = vmatpush1.msra.mxu0 0.0
        %505 = vmatprep.subr.mxu0 0.0
        %506 = vmatpush1.msra.mxu0 0.0
        %507 = vmatprep.subr.mxu0 0.0
        %508 = vmatpush1.msra.mxu0 0.0
        %509 = vmatprep.subr.mxu0 0.0
        %510 = vmatpush1.msra.mxu0 0.0
        %511 = vmatprep.subr.mxu0 0.0
        %512 = vmatpush1.msra.mxu0 %v479
        %513 = vmatprep.subr.mxu0 0.0
        %514 = vmatpush2.msra.mxu0 0.0
        %515 = vmatprep.subr.mxu0 0.0
        %516 = vmatpush2.msra.mxu0 0.0
        %517 = vmatprep.subr.mxu0 0.0
        %518 = vmatpush2.msra.mxu0 0.0
        %519 = vmatprep.subr.mxu0 0.0
        %520 = vmatpush2.msra.mxu0 0.0
        %521 = vmatprep.subr.mxu0 0.0
        %522 = vmatpush2.msra.mxu0 0.0
        %523 = vmatprep.subr.mxu0 0.0
        %524 = vmatpush2.msra.mxu0 0.0
        %525 = vmatprep.subr.mxu0 0.0
        %526 = vmatpush2.msra.mxu0 0.0
        %527 = vmatprep.subr.mxu0 0.0
        %528 = vmatpush2.msra.mxu0 0.0
        %529 = vmatprep.subr.mxu0 0.0
        %530 = vmatpush2.msra.mxu0 0.0
        %531 = vmatprep.subr.mxu0 0.0
        %532 = vmatpush2.msra.mxu0 0.0
        %533 = vmatprep.subr.mxu0 0.0
        %534 = vmatpush2.msra.mxu0 0.0
        %535 = vmatprep.subr.mxu0 0.0
        %536 = vmatpush2.msra.mxu0 0.0
        %537 = vmatprep.subr.mxu0 0.0
        %538 = vmatpush2.msra.mxu0 0.0
        %539 = vmatprep.subr.mxu0 0.0
        %540 = vmatpush2.msra.mxu0 0.0
        %541 = vmatprep.subr.mxu0 0.0
        %542 = vmatpush2.msra.mxu0 0.0
        %543 = vmatprep.subr.mxu0 0.0
        %544 = vmatpush2.msra.mxu0 0.0
        %545 = vmatprep.mubr.f32.mxu0 0.0
        %546 = vmatmul.mubr.f32.gmra.mxu0 %v466
        %v547 = vpop.f32.mrf.mxu0
        %v548 = vadd.f32 0.0, %v547
        %v549 = vpop.f32.mrf.mxu0
        %550 = vmatprep.mubr.f32.mxu0 0.0
        %551 = vmatmul.mubr.f32.gmra.mxu0 %v469
        %v552 = vpop.f32.mrf.mxu0
        %v553 = vadd.f32 0.0, %v552
        %v554 = vpop.f32.mrf.mxu0
        %555 = vmatprep.mubr.f32.mxu0 0.0
        %556 = vmatmul.mubr.f32.gmra.mxu0 %v472
        %v557 = vpop.f32.mrf.mxu0
        %v558 = vadd.f32 0.0, %v557
        %v559 = vpop.f32.mrf.mxu0
        %560 = vmatprep.mubr.f32.mxu0 0.0
        %561 = vmatmul.mubr.f32.gmra.mxu0 %v475
        %v562 = vpop.f32.mrf.mxu0
        %v563 = vadd.f32 0.0, %v562
        %v564 = vpop.f32.mrf.mxu0
        %565 = vdwg.mxu0
        %vm566 = vcmask 31744
        %v568 = vsel %vm566, %v454, 0
        %v571 = vsel %vm566, %v455, 0
        %v574 = vsel %vm566, %v456, 0
        %v577 = vsel %vm566, %v457, 0
        %vm579 = vcmask 1043456
        %v581 = vsel %vm579, %v458, 0
        %583 = vmatprep.subr.mxu0 0.0
        %584 = vmatpush1.msra.mxu0 0.0
        %585 = vmatprep.subr.mxu0 0.0
        %586 = vmatpush1.msra.mxu0 0.0
        %587 = vmatprep.subr.mxu0 0.0
        %588 = vmatpush1.msra.mxu0 0.0
        %589 = vmatprep.subr.mxu0 0.0
        %590 = vmatpush1.msra.mxu0 0.0
        %591 = vmatprep.subr.mxu0 0.0
        %592 = vmatpush1.msra.mxu0 0.0
        %593 = vmatprep.subr.mxu0 0.0
        %594 = vmatpush1.msra.mxu0 0.0
        %595 = vmatprep.subr.mxu0 0.0
        %596 = vmatpush1.msra.mxu0 0.0
        %597 = vmatprep.subr.mxu0 0.0
        %598 = vmatpush1.msra.mxu0 0.0
        %599 = vmatprep.subr.mxu0 0.0
        %600 = vmatpush1.msra.mxu0 0.0
        %601 = vmatprep.subr.mxu0 0.0
        %602 = vmatpush1.msra.mxu0 0.0
        %603 = vmatprep.subr.mxu0 0.0
        %604 = vmatpush1.msra.mxu0 0.0
        %605 = vmatprep.subr.mxu0 0.0
        %606 = vmatpush1.msra.mxu0 0.0
        %607 = vmatprep.subr.mxu0 0.0
        %608 = vmatpush1.msra.mxu0 0.0
        %609 = vmatprep.subr.mxu0 0.0
        %610 = vmatpush1.msra.mxu0 0.0
        %611 = vmatprep.subr.mxu0 0.0
        %612 = vmatpush1.msra.mxu0 0.0
        %613 = vmatprep.subr.mxu0 0.0
        %614 = vmatpush1.msra.mxu0 %v581
        %615 = vmatprep.subr.mxu0 0.0
        %616 = vmatpush2.msra.mxu0 0.0
        %617 = vmatprep.subr.mxu0 0.0
        %618 = vmatpush2.msra.mxu0 0.0
        %619 = vmatprep.subr.mxu0 0.0
        %620 = vmatpush2.msra.mxu0 0.0
        %621 = vmatprep.subr.mxu0 0.0
        %622 = vmatpush2.msra.mxu0 0.0
        %623 = vmatprep.subr.mxu0 0.0
        %624 = vmatpush2.msra.mxu0 0.0
        %625 = vmatprep.subr.mxu0 0.0
        %626 = vmatpush2.msra.mxu0 0.0
        %627 = vmatprep.subr.mxu0 0.0
        %628 = vmatpush2.msra.mxu0 0.0
        %629 = vmatprep.subr.mxu0 0.0
        %630 = vmatpush2.msra.mxu0 0.0
        %631 = vmatprep.subr.mxu0 0.0
        %632 = vmatpush2.msra.mxu0 0.0
        %633 = vmatprep.subr.mxu0 0.0
        %634 = vmatpush2.msra.mxu0 0.0
        %635 = vmatprep.subr.mxu0 0.0
        %636 = vmatpush2.msra.mxu0 0.0
        %637 = vmatprep.subr.mxu0 0.0
        %638 = vmatpush2.msra.mxu0 0.0
        %639 = vmatprep.subr.mxu0 0.0
        %640 = vmatpush2.msra.mxu0 0.0
        %641 = vmatprep.subr.mxu0 0.0
        %642 = vmatpush2.msra.mxu0 0.0
        %643 = vmatprep.subr.mxu0 0.0
        %644 = vmatpush2.msra.mxu0 0.0
        %645 = vmatprep.subr.mxu0 0.0
        %646 = vmatpush2.msra.mxu0 0.0
        %647 = vmatprep.mubr.f32.mxu0 0.0
        %648 = vmatmul.mubr.f32.gmra.mxu0 %v568
        %v649 = vpop.f32.mrf.mxu0
        %v650 = vadd.f32 %v548, %v649
        %v651 = vpop.f32.mrf.mxu0
        %652 = vmatprep.mubr.f32.mxu0 0.0
        %653 = vmatmul.mubr.f32.gmra.mxu0 %v571
        %v654 = vpop.f32.mrf.mxu0
        %v655 = vadd.f32 %v553, %v654
        %v656 = vpop.f32.mrf.mxu0
        %657 = vmatprep.mubr.f32.mxu0 0.0
        %658 = vmatmul.mubr.f32.gmra.mxu0 %v574
        %v659 = vpop.f32.mrf.mxu0
        %v660 = vadd.f32 %v558, %v659
        %v661 = vpop.f32.mrf.mxu0
        %662 = vmatprep.mubr.f32.mxu0 0.0
        %663 = vmatmul.mubr.f32.gmra.mxu0 %v577
        %v664 = vpop.f32.mrf.mxu0
        %v665 = vadd.f32 %v563, %v664
        %v666 = vpop.f32.mrf.mxu0
        %667 = vdwg.mxu0
        %v668 = vld [vmem:[%s7] sm:$0x1]
        %v670 = vlaneseq
        %v671 = vshrl.u32 %v670, 7
        %v672 = vsub.s32 0, %v671
        %v673 = vrot.slane %v668, %v672
        %v675 = vadd.f32 %v650, %v673
        %v676 = vadd.f32 %v655, %v673
        %v677 = vadd.f32 %v660, %v673
        %v678 = vadd.f32 %v665, %v673
        %v679 = vmax.f32 %v675, 0.0
        %v680 = vmax.f32 %v676, 0.0
        %v681 = vmax.f32 %v677, 0.0
        %v682 = vmax.f32 %v678, 0.0
        %v683 = vld [vmem:[%s8] sm:$0xff]
        %v684 = vld [vmem:[%s8 + $0x8] sm:$0xff]
        %v685 = vld [vmem:[%s8 + $0x10] sm:$0xff]
        %v686 = vld [vmem:[%s8 + $0x18] sm:$0xff]
        %v687 = vld [vmem:[%s9] sm:$0x1]
        %v689 = vlaneseq
        %v690 = vshrl.u32 %v689, 7
        %v691 = vsub.s32 0, %v690
        %v692 = vrot.slane %v687, %v691
        %vm694 = vcmask 261120
        %v696 = vsel %vm694, %v679, 0
        %v699 = vsel %vm694, %v680, 0
        %v702 = vsel %vm694, %v681, 0
        %v705 = vsel %vm694, %v682, 0
        %707 = vmatprep.subr.mxu0 0.0
        %708 = vmatpush1.msra.mxu0 0.0
        %709 = vmatprep.subr.mxu0 0.0
        %710 = vmatpush1.msra.mxu0 0.0
        %711 = vmatprep.subr.mxu0 0.0
        %712 = vmatpush1.msra.mxu0 0.0
        %713 = vmatprep.subr.mxu0 0.0
        %714 = vmatpush1.msra.mxu0 0.0
        %715 = vmatprep.subr.mxu0 0.0
        %716 = vmatpush1.msra.mxu0 0.0
        %717 = vmatprep.subr.mxu0 0.0
        %718 = vmatpush1.msra.mxu0 0.0
        %719 = vmatprep.subr.mxu0 0.0
        %720 = vmatpush1.msra.mxu0 0.0
        %721 = vmatprep.subr.mxu0 0.0
        %722 = vmatpush1.msra.mxu0 0.0
        %723 = vmatprep.subr.mxu0 0.0
        %724 = vmatpush1.msra.mxu0 0.0
        %725 = vmatprep.subr.mxu0 0.0
        %726 = vmatpush1.msra.mxu0 0.0
        %727 = vmatprep.subr.mxu0 0.0
        %728 = vmatpush1.msra.mxu0 0.0
        %729 = vmatprep.subr.mxu0 0.0
        %730 = vmatpush1.msra.mxu0 0.0
        %731 = vmatprep.subr.mxu0 0.0
        %732 = vmatpush1.msra.mxu0 %v686
        %733 = vmatprep.subr.mxu0 0.0
        %734 = vmatpush1.msra.mxu0 %v685
        %735 = vmatprep.subr.mxu0 0.0
        %736 = vmatpush1.msra.mxu0 %v684
        %737 = vmatprep.subr.mxu0 0.0
        %738 = vmatpush1.msra.mxu0 %v683
        %739 = vmatprep.subr.mxu0 0.0
        %740 = vmatpush2.msra.mxu0 0.0
        %741 = vmatprep.subr.mxu0 0.0
        %742 = vmatpush2.msra.mxu0 0.0
        %743 = vmatprep.subr.mxu0 0.0
        %744 = vmatpush2.msra.mxu0 0.0
        %745 = vmatprep.subr.mxu0 0.0
        %746 = vmatpush2.msra.mxu0 0.0
        %747 = vmatprep.subr.mxu0 0.0
        %748 = vmatpush2.msra.mxu0 0.0
        %749 = vmatprep.subr.mxu0 0.0
        %750 = vmatpush2.msra.mxu0 0.0
        %751 = vmatprep.subr.mxu0 0.0
        %752 = vmatpush2.msra.mxu0 0.0
        %753 = vmatprep.subr.mxu0 0.0
        %754 = vmatpush2.msra.mxu0 0.0
        %755 = vmatprep.subr.mxu0 0.0
        %756 = vmatpush2.msra.mxu0 0.0
        %757 = vmatprep.subr.mxu0 0.0
        %758 = vmatpush2.msra.mxu0 0.0
        %759 = vmatprep.subr.mxu0 0.0
        %760 = vmatpush2.msra.mxu0 0.0
        %761 = vmatprep.subr.mxu0 0.0
        %762 = vmatpush2.msra.mxu0 0.0
        %763 = vmatprep.subr.mxu0 0.0
        %764 = vmatpush2.msra.mxu0 0.0
        %765 = vmatprep.subr.mxu0 0.0
        %766 = vmatpush2.msra.mxu0 0.0
        %767 = vmatprep.subr.mxu0 0.0
        %768 = vmatpush2.msra.mxu0 0.0
        %769 = vmatprep.subr.mxu0 0.0
        %770 = vmatpush2.msra.mxu0 0.0
        %771 = vmatprep.mubr.f32.mxu0 0.0
        %772 = vmatmul.mubr.f32.gmra.mxu0 %v696
        %v773 = vpop.f32.mrf.mxu0
        %v774 = vadd.f32 %v692, %v773
        %v775 = vpop.f32.mrf.mxu0
        %776 = vmatprep.mubr.f32.mxu0 0.0
        %777 = vmatmul.mubr.f32.gmra.mxu0 %v699
        %v778 = vpop.f32.mrf.mxu0
        %v779 = vadd.f32 %v692, %v778
        %v780 = vpop.f32.mrf.mxu0
        %781 = vmatprep.mubr.f32.mxu0 0.0
        %782 = vmatmul.mubr.f32.gmra.mxu0 %v702
        %v783 = vpop.f32.mrf.mxu0
        %v784 = vadd.f32 %v692, %v783
        %v785 = vpop.f32.mrf.mxu0
        %786 = vmatprep.mubr.f32.mxu0 0.0
        %787 = vmatmul.mubr.f32.gmra.mxu0 %v705
        %v788 = vpop.f32.mrf.mxu0
        %v789 = vadd.f32 %v692, %v788
        %v790 = vpop.f32.mrf.mxu0
        %791 = vdwg.mxu0
        %v792 = vmax.f32 %v774, 0.0
        %v793 = vmax.f32 %v779, 0.0
        %v794 = vmax.f32 %v784, 0.0
        %v795 = vmax.f32 %v789, 0.0
        %v796 = vld [vmem:[%s10] sm:$0xff]
        %v797 = vld [vmem:[%s10 + $0x8] sm:$0xff]
        %v798 = vld [vmem:[%s10 + $0x10] sm:$0xff]
        %v799 = vld [vmem:[%s10 + $0x18] sm:$0xff]
        %v800 = vld [vmem:[%s11] sm:$0x1]
        %v802 = vlaneseq
        %v803 = vshrl.u32 %v802, 7
        %v804 = vsub.s32 0, %v803
        %v805 = vrot.slane %v800, %v804
        %v808 = vsel %vm694, %v792, 0
        %v811 = vsel %vm694, %v793, 0
        %v814 = vsel %vm694, %v794, 0
        %v817 = vsel %vm694, %v795, 0
        %819 = vmatprep.subr.mxu0 0.0
        %820 = vmatpush1.msra.mxu0 0.0
        %821 = vmatprep.subr.mxu0 0.0
        %822 = vmatpush1.msra.mxu0 0.0
        %823 = vmatprep.subr.mxu0 0.0
        %824 = vmatpush1.msra.mxu0 0.0
        %825 = vmatprep.subr.mxu0 0.0
        %826 = vmatpush1.msra.mxu0 0.0
        %827 = vmatprep.subr.mxu0 0.0
        %828 = vmatpush1.msra.mxu0 0.0
        %829 = vmatprep.subr.mxu0 0.0
        %830 = vmatpush1.msra.mxu0 0.0
        %831 = vmatprep.subr.mxu0 0.0
        %832 = vmatpush1.msra.mxu0 0.0
        %833 = vmatprep.subr.mxu0 0.0
        %834 = vmatpush1.msra.mxu0 0.0
        %835 = vmatprep.subr.mxu0 0.0
        %836 = vmatpush1.msra.mxu0 0.0
        %837 = vmatprep.subr.mxu0 0.0
        %838 = vmatpush1.msra.mxu0 0.0
        %839 = vmatprep.subr.mxu0 0.0
        %840 = vmatpush1.msra.mxu0 0.0
        %841 = vmatprep.subr.mxu0 0.0
        %842 = vmatpush1.msra.mxu0 0.0
        %843 = vmatprep.subr.mxu0 0.0
        %844 = vmatpush1.msra.mxu0 %v799
        %845 = vmatprep.subr.mxu0 0.0
        %846 = vmatpush1.msra.mxu0 %v798
        %847 = vmatprep.subr.mxu0 0.0
        %848 = vmatpush1.msra.mxu0 %v797
        %849 = vmatprep.subr.mxu0 0.0
        %850 = vmatpush1.msra.mxu0 %v796
        %851 = vmatprep.subr.mxu0 0.0
        %852 = vmatpush2.msra.mxu0 0.0
        %853 = vmatprep.subr.mxu0 0.0
        %854 = vmatpush2.msra.mxu0 0.0
        %855 = vmatprep.subr.mxu0 0.0
        %856 = vmatpush2.msra.mxu0 0.0
        %857 = vmatprep.subr.mxu0 0.0
        %858 = vmatpush2.msra.mxu0 0.0
        %859 = vmatprep.subr.mxu0 0.0
        %860 = vmatpush2.msra.mxu0 0.0
        %861 = vmatprep.subr.mxu0 0.0
        %862 = vmatpush2.msra.mxu0 0.0
        %863 = vmatprep.subr.mxu0 0.0
        %864 = vmatpush2.msra.mxu0 0.0
        %865 = vmatprep.subr.mxu0 0.0
        %866 = vmatpush2.msra.mxu0 0.0
        %867 = vmatprep.subr.mxu0 0.0
        %868 = vmatpush2.msra.mxu0 0.0
        %869 = vmatprep.subr.mxu0 0.0
        %870 = vmatpush2.msra.mxu0 0.0
        %871 = vmatprep.subr.mxu0 0.0
        %872 = vmatpush2.msra.mxu0 0.0
        %873 = vmatprep.subr.mxu0 0.0
        %874 = vmatpush2.msra.mxu0 0.0
        %875 = vmatprep.subr.mxu0 0.0
        %876 = vmatpush2.msra.mxu0 0.0
        %877 = vmatprep.subr.mxu0 0.0
        %878 = vmatpush2.msra.mxu0 0.0
        %879 = vmatprep.subr.mxu0 0.0
        %880 = vmatpush2.msra.mxu0 0.0
        %881 = vmatprep.subr.mxu0 0.0
        %882 = vmatpush2.msra.mxu0 0.0
        %883 = vmatprep.mubr.f32.mxu0 0.0
        %884 = vmatmul.mubr.f32.gmra.mxu0 %v808
        %v885 = vpop.f32.mrf.mxu0
        %v886 = vadd.f32 %v805, %v885
        %v887 = vpop.f32.mrf.mxu0
        %888 = vmatprep.mubr.f32.mxu0 0.0
        %889 = vmatmul.mubr.f32.gmra.mxu0 %v811
        %v890 = vpop.f32.mrf.mxu0
        %v891 = vadd.f32 %v805, %v890
        %v892 = vpop.f32.mrf.mxu0
        %893 = vmatprep.mubr.f32.mxu0 0.0
        %894 = vmatmul.mubr.f32.gmra.mxu0 %v814
        %v895 = vpop.f32.mrf.mxu0
        %v896 = vadd.f32 %v805, %v895
        %v897 = vpop.f32.mrf.mxu0
        %898 = vmatprep.mubr.f32.mxu0 0.0
        %899 = vmatmul.mubr.f32.gmra.mxu0 %v817
        %v900 = vpop.f32.mrf.mxu0
        %v901 = vadd.f32 %v805, %v900
        %v902 = vpop.f32.mrf.mxu0
        %903 = vdwg.mxu0
        %v904 = vld [vmem:[%s446] sm:$0xff]
        %v905 = vld [vmem:[%s446 + $0x8] sm:$0xff]
        %v906 = vld [vmem:[%s446 + $0x10] sm:$0xff]
        %v907 = vld [vmem:[%s446 + $0x18] sm:$0xff]
        %s908 = sadd.s32 %s40, %s41
        %s909 = sld [smem:[#allocation3 + %s908]]
        %s910 = sld [smem:[#allocation4 + %s908]]
        %s911 = sadd.s32 %s910, 1
        // While loop
        $region65: #{tpu_custom_call.1} parent=59 // loop_pre_header
          _
        $region66: #{tpu_custom_call.1} parent=59 // loop_header
          %s913 = sphi %s909, %s915
          %p914 = scmp.ge.s32.totalorder %s913, %s911
        $region67: #{tpu_custom_call.1} parent=59 // loop_header_branch
          %917 = sbr.rel (%p914) target = $region71
        $region68: #{tpu_custom_call.1} parent=59 // loop_body
          %v918 = vstv %s913
          %vm919 = vcmp.eq.s32.totalorder %v904, %v918
          %vm920 = vcmp.eq.s32.totalorder %v905, %v918
          %vm921 = vcmp.eq.s32.totalorder %v906, %v918
          %vm922 = vcmp.eq.s32.totalorder %v907, %v918
          %v923 = vsel %vm919, 1, 0
          %v924 = vsel %vm920, 1, 0
          %v925 = vsel %vm921, 1, 0
          %v926 = vsel %vm922, 1, 0
          %927 = vset.pattern.permute.xlu0 0
          %928 = vperm.xlu0 %927, %v923
          %v929 = vpop.permute.xlu0 %928
          %930 = vset.pattern.permute.xlu0 0
          %931 = vperm.xlu0 %930, %v924
          %v932 = vpop.permute.xlu0 %931
          %933 = vset.pattern.permute.xlu0 0
          %934 = vperm.xlu0 %933, %v925
          %v935 = vpop.permute.xlu0 %934
          %936 = vset.pattern.permute.xlu0 0
          %937 = vperm.xlu0 %936, %v926
          %v938 = vpop.permute.xlu0 %937
          %vm939 = vcmp.eq.s32.totalorder %v929, 1
          %vm940 = vcmp.eq.s32.totalorder %v932, 1
          %vm941 = vcmp.eq.s32.totalorder %v935, 1
          %vm942 = vcmp.eq.s32.totalorder %v938, 1
          %v943 = vsel %vm939, %v886, -inf
          %v944 = vsel %vm940, %v891, -inf
          %v945 = vsel %vm941, %v896, -inf
          %v946 = vsel %vm942, %v901, -inf
          %v947 = vmax.f32 %v943, %v944
          %v948 = vmax.f32 %v945, %v946
          %v949 = vmax.f32 %v947, %v948
          %v950 = vrot.slane %v949, 4
          %v951 = vmax.f32 %v949, %v950
          %v952 = vrot.slane %v951, 2
          %v953 = vmax.f32 %v951, %v952
          %v954 = vrot.slane %v953, 1
          %v955 = vmax.f32 %v953, %v954
          %s956 = scalar_lea.vmem %s424, %s913 [#allocation5]
          %v957 = vld [vmem:[%s956] sm:$0x1]
          %v958 = vmax.f32 %v957, %v955
          %959 = vst [vmem:[%s956] sm:$0x1] %v958
        $region69: #{tpu_custom_call.1} parent=59 // loop_footer
          %s915 = sadd.s32 %s913, 1
        $region70: #{tpu_custom_call.1} parent=59 // loop_footer_branch
          %912 = sbr.rel target = $region66
        $region71: #{tpu_custom_call.1} parent=59 // loop_exit
          _
        %s960 = sand.u32 %s287, 1
        %s961 = scalar_lea.sflag [#allocation6], %s960
        %s962 = sand.u32 %s287, 1
        %s963 = smul.addr %s962, 4
        %s964 = scalar_lea.vmem [#allocation5], %s963
        // Predicated region
        $region72: #{tpu_custom_call.1} parent=59 // pred_check
          %p965 = pneg %p297
        $region73: #{tpu_custom_call.1} parent=59 // pred_check_branch
          %967 = sbr.rel (%p965) target = $region75
        $region74: #{tpu_custom_call.1} parent=59 // pred_region
          %s969 = ssub.s32 64, 64
          %970 = vsyncadd %s961, %s969
          %s971 = smul.addr %s40, 64
          %s972 = scalar_lea.hbm %s12, %s971
          %s974 = sshll.u32 %s964, 4
          %s975 = int_to_ptr.vmem [resolvable:$true] %s974
          %977 = dma.vmem_to_hbm [thread:$0]  %s975, 64, %s972, %s961
        $region75: #{tpu_custom_call.1} parent=59 // pred_fallthru
          _
      $region60: #{tpu_custom_call.1} parent=5 // pred_fallthru
        _
      %p978 = scmp.le.s32.totalorder 2, %s31
      // Predicated region
      $region76: #{tpu_custom_call.1} parent=5 // pred_check
        %p979 = pneg %p978
      $region77: #{tpu_custom_call.1} parent=5 // pred_check_branch
        %981 = sbr.rel (%p979) target = $region79
      $region78: #{tpu_custom_call.1} parent=5 // pred_region
        %s982 = ssub.s32 %s31, 2
        // Predicated region
        $region80: #{tpu_custom_call.1} parent=78 // pred_check
          %p983 = pneg %p303
        $region81: #{tpu_custom_call.1} parent=78 // pred_check_branch
          %985 = sbr.rel (%p983) target = $region83
        $region82: #{tpu_custom_call.1} parent=78 // pred_region
          %s986 = sand.u32 %s288, 1
          %s987 = scalar_lea.sflag [#allocation6], %s986
          %s988 = sand.u32 %s288, 1
          %s989 = smul.addr %s988, 4
          %s990 = scalar_lea.vmem [#allocation5], %s989
          %991 = dma.done %s987, 64
        $region83: #{tpu_custom_call.1} parent=78 // pred_fallthru
          _
      $region79: #{tpu_custom_call.1} parent=5 // pred_fallthru
        _
    $region6: #{tpu_custom_call.1} parent=1 // loop_footer
      %s35 = sadd.s32 1, %s31
    $region7: #{tpu_custom_call.1} parent=1 // loop_footer_branch
      %30 = sbr.rel target = $region3
    $region8: #{tpu_custom_call.1} parent=1 // loop_exit
      _
    %992 = vsyncpa [#allocation6], 1
    %s993 = scalar_lea.sflag [#allocation6], 1
    %994 = vsyncpa %s993, 1

</llo_original>
